<compile_context>
chip_gen: v5e
topology: v5e:2x2
jax: 0.10.0
libtpu: 0.0.40
codegen_flags: <defaults>
</compile_context>

<pallas_src>
import jax
import jax.numpy as jnp
from jax.experimental import pallas as pl
from jax.experimental.pallas import tpu as pltpu

NODE_FEATURES = 4      # node_features of RecurrentGCN
HIDDEN = 64            # DCRNN out_channels
K = 3                  # diffusion steps
NUM_HOPS = 2 * (K - 1) + 1   # [T0, T1_f, T1_b, ..., T(K-1)_f, T(K-1)_b]
OUT_FEATURES = 4       # final Linear(64, 4)
OUT_PAD = 128          # lane-dense padded output width (sliced in the wrapper)

# Propagation matmul operand dtype (review: bf16 MXU + halved P footprint).
# Set to jnp.float32 to recover a near-exact match with the f32 reference.
PROP_DTYPE = jnp.bfloat16


# --------------------------------------------------------------------------
# In-kernel helpers (no lane concatenation; per-hop accumulate)
# --------------------------------------------------------------------------
def _diffusion_hops(feat, pf, pb):
    """Return the NUM_HOPS diffusion hops [T0, T1_f, T1_b, ...] of `feat`.

    Propagation matmuls run with PROP_DTYPE (bf16) operands and f32
    accumulation; the Chebyshev-like recurrence itself stays f32.
    """
    f32 = jnp.float32
    hops = [feat]
    t0f = t0b = feat
    t1f = jnp.dot(pf, feat.astype(pf.dtype), preferred_element_type=f32)
    t1b = jnp.dot(pb, feat.astype(pb.dtype), preferred_element_type=f32)
    hops += [t1f, t1b]
    for _ in range(2, K):
        t2f = 2.0 * jnp.dot(pf, t1f.astype(pf.dtype),
                            preferred_element_type=f32) - t0f
        t2b = 2.0 * jnp.dot(pb, t1b.astype(pb.dtype),
                            preferred_element_type=f32) - t0b
        hops += [t2f, t2b]
        t0f, t1f = t1f, t2f
        t0b, t1b = t1b, t2b
    return hops


def _apply_hop_weights(hops, w_ref):
    """sum_k hops[k] @ w_ref[k]; w_ref is (NUM_HOPS, IN, OUT), leading-axis
    stacked (hop order matches _diffusion_hops, k=0 direction-summed)."""
    acc = jnp.dot(hops[0], w_ref[0], preferred_element_type=jnp.float32)
    for k in range(1, len(hops)):
        acc = acc + jnp.dot(hops[k], w_ref[k],
                            preferred_element_type=jnp.float32)
    return acc


# --------------------------------------------------------------------------
# Kernels
# --------------------------------------------------------------------------
def dcrnn_stateless_kernel(x_ref, p_ref, wx_zh_ref, b_zh_ref,
                           lw_ref, lb_ref, out_ref):
    """Single step with H == 0 (exactly RecurrentGCN.forward): the R gate and
    every h-side term vanish because they only multiply zeros."""
    x = x_ref[...]                     # (N, F) f32
    pf = p_ref[0]                      # (N, N) PROP_DTYPE, D_out^-1 A
    pb = p_ref[1]                      # (N, N) PROP_DTYPE, D_in^-1  A^T

    hops_x = _diffusion_hops(x, pf, pb)
    zh = _apply_hop_weights(hops_x, wx_zh_ref) + b_zh_ref[...]   # (N, 128)=[z|h~]
    # NOTE: slicing the packed 128-wide result costs a 64-lane roll; XLU has
    # slack here, keeping the single 128-wide matmul is the right trade.
    z = jax.nn.sigmoid(zh[:, :HIDDEN])
    h_tilde = jnp.tanh(zh[:, HIDDEN:])
    h_new = (1.0 - z) * h_tilde        # Z * H == 0

    h_act = jnp.maximum(h_new, 0.0)    # F.relu
    out_ref[...] = (jnp.dot(h_act, lw_ref[...],
                            preferred_element_type=jnp.float32)
                    + lb_ref[...])     # lane-dense padded Linear


def dcrnn_seq_kernel(x_ref, h0_ref, p_ref,
                     wx_zr_ref, wh_zr_ref, b_zr_ref,
                     wx_h_ref, wh_h_ref, b_h_ref,
                     lw_ref, lb_ref,
                     out_ref, hfin_ref, h_scr):
    """Fused recurrence over grid=(T,): H carried in VMEM scratch, P/weights
    resident, x_t streamed, per-step Linear(ReLU(H_t)) written lane-dense."""
    t = pl.program_id(0)

    @pl.when(t == 0)
    def _():
        h_scr[...] = h0_ref[...]

    x = x_ref[0]                       # (N, F)  f32
    h = h_scr[...]                     # (N, 64) f32
    pf = p_ref[0]
    pb = p_ref[1]

    # x hops are independent of h/r: computed once, shared by both gate passes.
    hops_x = _diffusion_hops(x, pf, pb)
    hops_h = _diffusion_hops(h, pf, pb)

    zr = (_apply_hop_weights(hops_x, wx_zr_ref)
          + _apply_hop_weights(hops_h, wh_zr_ref)
          + b_zr_ref[...])                                  # (N, 128) = [z|r]
    z = jax.nn.sigmoid(zr[:, :HIDDEN])
    r = jax.nn.sigmoid(zr[:, HIDDEN:])

    hops_hr = _diffusion_hops(h * r, pf, pb)
    h_tilde = jnp.tanh(_apply_hop_weights(hops_x, wx_h_ref)
                       + _apply_hop_weights(hops_hr, wh_h_ref)
                       + b_h_ref[...])                      # (N, 64)

    h_new = z * h + (1.0 - z) * h_tilde
    h_scr[...] = h_new                 # carry to t+1

    h_act = jnp.maximum(h_new, 0.0)
    out_ref[0] = (jnp.dot(h_act, lw_ref[...],
                          preferred_element_type=jnp.float32)
                  + lb_ref[...])

    @pl.when(t == pl.num_programs(0) - 1)
    def _():
        hfin_ref[...] = h_new


# --------------------------------------------------------------------------
# Wrapper-side prep (hoisted: do ONCE per graph / params, not per call)
# --------------------------------------------------------------------------
def _dense_transitions(edge_index, edge_weight, num_nodes):
    # TODO(synk): scatter-based (edge-list) message passing has no clean Pallas
    # equivalent at these sizes; densified here and matmul'd in the kernel.
    adj = jnp.zeros((num_nodes, num_nodes), jnp.float32).at[
        edge_index[0], edge_index[1]].add(edge_weight.astype(jnp.float32))
    deg_out = adj.sum(axis=1)
    deg_in = adj.sum(axis=0)
    inv_out = jnp.where(deg_out > 0, 1.0 / deg_out, 0.0)   # guard 0-degree
    inv_in = jnp.where(deg_in > 0, 1.0 / deg_in, 0.0)
    pf = adj * inv_out[:, None]        # D_out^-1 A
    pb = adj.T * inv_in[:, None]       # D_in^-1  A^T
    return pf, pb


def prepare_graph(edge_index, edge_weight, num_nodes, dtype=PROP_DTYPE):
    """(2, N, N) stacked [P_f, P_b] in the propagation dtype (one DMA)."""
    pf, pb = _dense_transitions(edge_index, edge_weight, num_nodes)
    return jnp.stack([pf, pb]).astype(dtype)


def _stack_hop_weights(w_gate):
    """(2, K, IN, OUT) -> (NUM_HOPS, IN, OUT), hop order [k0 fwd+bwd summed,
    k1_f, k1_b, ..., k(K-1)_f, k(K-1)_b]; the k=0 direction-sum is folded here
    so the kernel does no weight adds."""
    blocks = [w_gate[0, 0] + w_gate[1, 0]]
    for k in range(1, K):
        blocks.append(w_gate[0, k])
        blocks.append(w_gate[1, k])
    return jnp.stack(blocks, axis=0)


def prepare_params(params, node_features=NODE_FEATURES):
    """Pack canonical DCRNN weights into leading-axis hop stacks, split into
    x-part / h-part (so the kernel never lane-concatenates [x|h])."""
    w, b = params["w"], params["b"]    # (3, 2, K, F+H, H), (3, H)
    f = node_features
    wz, wr, wh = w[0], w[1], w[2]
    return dict(
        # z/r gate pair: columns [z | r]
        wx_zr=jnp.concatenate([_stack_hop_weights(wz[:, :, :f, :]),
                               _stack_hop_weights(wr[:, :, :f, :])], axis=-1),
        wh_zr=jnp.concatenate([_stack_hop_weights(wz[:, :, f:, :]),
                               _stack_hop_weights(wr[:, :, f:, :])], axis=-1),
        b_zr=jnp.concatenate([b[0], b[1]])[None, :],
        # candidate gate
        wx_h=_stack_hop_weights(wh[:, :, :f, :]),
        wh_h=_stack_hop_weights(wh[:, :, f:, :]),
        b_h=b[2][None, :],
        # stateless (H = 0) path: columns [z | h_tilde], x-rows only
        wx_zh=jnp.concatenate([_stack_hop_weights(wz[:, :, :f, :]),
                               _stack_hop_weights(wh[:, :, :f, :])], axis=-1),
        b_zh=jnp.concatenate([b[0], b[2]])[None, :],
        # lane-dense final Linear (padded to 128 lanes, sliced in wrapper)
        lw_pad=jnp.zeros((HIDDEN, OUT_PAD), jnp.float32)
              .at[:, :OUT_FEATURES].set(params["lin_w"]),
        lb_pad=jnp.zeros((1, OUT_PAD), jnp.float32)
              .at[0, :OUT_FEATURES].set(params["lin_b"]),
    )


# --------------------------------------------------------------------------
# Forward wrappers
# --------------------------------------------------------------------------
def recurrent_gcn_forward(x, edge_index, edge_weight, params, *,
                          p=None, packed=None):
    """Exact RecurrentGCN.forward: DCRNN(x, ei, ew, H=None) -> ReLU -> Linear."""
    n, f = x.shape
    if p is None:
        p = prepare_graph(edge_index, edge_weight, n)
    if packed is None:
        packed = prepare_params(params, node_features=f)
    vmem = pl.BlockSpec(memory_space=pltpu.MemorySpace.VMEM)
    out = pl.pallas_call(
        dcrnn_stateless_kernel,
        out_shape=jax.ShapeDtypeStruct((n, OUT_PAD), jnp.float32),
        in_specs=[vmem] * 6,
        out_specs=vmem,
    )(x.astype(jnp.float32), p, packed["wx_zh"], packed["b_zh"],
      packed["lw_pad"], packed["lb_pad"])
    return out[:, :OUT_FEATURES]


def recurrent_gcn_forward_sequence(x_seq, p, packed, h0=None):
    """Fused recurrent workload: y_t = Linear(ReLU(H_t)) for t = 0..T-1 with
    H carried across steps.  One pallas_call, grid=(T,)."""
    t_steps, n, f = x_seq.shape
    if h0 is None:
        h0 = jnp.zeros((n, HIDDEN), jnp.float32)
    x_seq = x_seq.astype(jnp.float32)
    h0 = h0.astype(jnp.float32)

    pin2 = lambda t: (0, 0)
    pin3 = lambda t: (0, 0, 0)
    # TODO(synk): for large N, row-tile P with an extra "parallel" grid axis
    # (block (2, TILE_N, N)) and raise vmem_limit_bytes per generation
    # (v5e 128-aligned tiles / 16 MiB scoped default, v6e 256-aligned / 128 MiB,
    # v7x 64 MiB physical) -- unnecessary at these test sizes.
    grid_spec = pltpu.PrefetchScalarGridSpec(
        num_scalar_prefetch=0,
        grid=(t_steps,),
        in_specs=[
            pl.BlockSpec((1, n, f), lambda t: (t, 0, 0)),             # x_t
            pl.BlockSpec((n, HIDDEN), pin2),                          # h0
            pl.BlockSpec((2, n, n), pin3),                            # P (resident)
            pl.BlockSpec((NUM_HOPS, f, 2 * HIDDEN), pin3),            # Wx [z|r]
            pl.BlockSpec((NUM_HOPS, HIDDEN, 2 * HIDDEN), pin3),       # Wh [z|r]
            pl.BlockSpec((1, 2 * HIDDEN), pin2),                      # b  [z|r]
            pl.BlockSpec((NUM_HOPS, f, HIDDEN), pin3),                # Wx h~
            pl.BlockSpec((NUM_HOPS, HIDDEN, HIDDEN), pin3),           # Wh h~
            pl.BlockSpec((1, HIDDEN), pin2),                          # b  h~
            pl.BlockSpec((HIDDEN, OUT_PAD), pin2),                    # Linear W
            pl.BlockSpec((1, OUT_PAD), pin2),                         # Linear b
        ],
        out_specs=[
            pl.BlockSpec((1, n, OUT_PAD), lambda t: (t, 0, 0)),       # y_t
            pl.BlockSpec((n, HIDDEN), pin2),                          # final H
        ],
        scratch_shapes=[pltpu.VMEM((n, HIDDEN), jnp.float32)],        # carried H
    )
    y_pad, h_final = pl.pallas_call(
        dcrnn_seq_kernel,
        out_shape=(jax.ShapeDtypeStruct((t_steps, n, OUT_PAD), jnp.float32),
                   jax.ShapeDtypeStruct((n, HIDDEN), jnp.float32)),
        grid_spec=grid_spec,
        compiler_params=pltpu.CompilerParams(
            dimension_semantics=("arbitrary",)),      # true time recurrence
    )(x_seq, h0, p, packed["wx_zr"], packed["wh_zr"], packed["b_zr"],
      packed["wx_h"], packed["wh_h"], packed["b_h"],
      packed["lw_pad"], packed["lb_pad"])
    return y_pad[:, :, :OUT_FEATURES], h_final


# --------------------------------------------------------------------------
# Params + pure-JAX f32 reference (for validation)
# --------------------------------------------------------------------------
def init_params(key):
    """Glorot weights, small NONZERO biases (exercises the bias packing order)."""
    kz, kr, kh, kl, kb, kbl = jax.random.split(key, 6)

    def glorot(k, shape, fan_in, fan_out):
        limit = (6.0 / (fan_in + fan_out)) ** 0.5
        return jax.random.uniform(k, shape, jnp.float32, -limit, limit)

    in_dim = NODE_FEATURES + HIDDEN
    # Canonical DCRNN weights: (gate z/r/h, direction fwd/bwd, k, in, out).
    w = jnp.stack([glorot(k, (2, K, in_dim, HIDDEN), in_dim, HIDDEN)
                   for k in (kz, kr, kh)])
    b = 0.1 * jax.random.normal(kb, (3, HIDDEN), jnp.float32)
    lin_w = glorot(kl, (HIDDEN, OUT_FEATURES), HIDDEN, OUT_FEATURES)
    lin_b = 0.1 * jax.random.normal(kbl, (OUT_FEATURES,), jnp.float32)
    return dict(w=w, b=b, lin_w=lin_w, lin_b=lin_b)


_HI = jax.lax.Precision.HIGHEST


def _ref_cell(x, pf, pb, params, h):
    """Pure-JAX f32 reference (exact-f32 matmuls) of one DCRNN cell + ReLU +
    Linear.  Returns (y, h_new)."""
    def dconv(gate, feat):
        w = params["w"][gate]
        acc = jnp.dot(feat, w[0, 0] + w[1, 0], precision=_HI)
        t1f = jnp.dot(pf, feat, precision=_HI)
        t1b = jnp.dot(pb, feat, precision=_HI)
        acc += jnp.dot(t1f, w[0, 1], precision=_HI)
        acc += jnp.dot(t1b, w[1, 1], precision=_HI)
        t0f = t0b = feat
        for k in range(2, K):
            t2f = 2.0 * jnp.dot(pf, t1f, precision=_HI) - t0f
            t2b = 2.0 * jnp.dot(pb, t1b, precision=_HI) - t0b
            acc += jnp.dot(t2f, w[0, k], precision=_HI)
            acc += jnp.dot(t2b, w[1, k], precision=_HI)
            t0f, t1f = t1f, t2f
            t0b, t1b = t1b, t2b
        return acc + params["b"][gate]

    xh = jnp.concatenate([x, h], -1)
    z = jax.nn.sigmoid(dconv(0, xh))
    r = jax.nn.sigmoid(dconv(1, xh))
    h_t = jnp.tanh(dconv(2, jnp.concatenate([x, h * r], -1)))
    h_new = z * h + (1.0 - z) * h_t
    y = jnp.dot(jnp.maximum(h_new, 0.0), params["lin_w"],
                precision=_HI) + params["lin_b"]
    return y, h_new


if __name__ == "__main__":
    key = jax.random.PRNGKey(0)
    kx, kw_, kp, kseq = jax.random.split(key, 4)

    n = 16          # graph nodes
    t_steps = 8     # fused-recurrence length
    x = jax.random.normal(kx, (n, NODE_FEATURES), jnp.float32)

    # Bidirectional ring + self loops: every node has in/out degree > 0.
    src = jnp.arange(n, dtype=jnp.int32)
    dst = (src + 1) % n
    edge_index = jnp.stack([jnp.concatenate([src, dst, src]),
                            jnp.concatenate([dst, src, src])])
    edge_weight = jax.random.uniform(kw_, (edge_index.shape[1],),
                                     jnp.float32, 0.5, 1.5)

    params = init_params(kp)
    packed = prepare_params(params)                       # hoisted: once per params
    p = prepare_graph(edge_index, edge_weight, n)         # hoisted: once per graph
    pf32, pb32 = _dense_transitions(edge_index, edge_weight, n)

    # Tolerances: propagation matmuls use bf16 operands (review item), so the
    # comparison against the exact-f32 reference is bounded by bf16 rounding
    # (single step: ~3e-3 observed headroom; compounds over the T-step
    # recurrence).  With PROP_DTYPE=jnp.float32 both drop to ~1e-3.
    tol_step = 2e-2 if PROP_DTYPE == jnp.bfloat16 else 2e-3
    tol_seq = 8e-2 if PROP_DTYPE == jnp.bfloat16 else 2e-3

    # 1) Module forward: DCRNN called with H=None (stateless kernel).
    out = jax.block_until_ready(
        recurrent_gcn_forward(x, edge_index, edge_weight, params,
                              p=p, packed=packed))
    assert out.shape == (n, OUT_FEATURES) and out.dtype == jnp.float32
    ref0, _ = _ref_cell(x, pf32, pb32, params,
                        jnp.zeros((n, HIDDEN), jnp.float32))
    err0 = float(jnp.max(jnp.abs(out - ref0)))
    assert err0 < tol_step, f"stateless mismatch: {err0}"

    # 2) Fused recurrence: grid=(T,), H carried in VMEM scratch.
    x_seq = jax.random.normal(kseq, (t_steps, n, NODE_FEATURES), jnp.float32)
    y_seq, h_fin = jax.block_until_ready(
        recurrent_gcn_forward_sequence(x_seq, p, packed))
    assert y_seq.shape == (t_steps, n, OUT_FEATURES)
    assert h_fin.shape == (n, HIDDEN)

    h_ref = jnp.zeros((n, HIDDEN), jnp.float32)
    err_seq = 0.0
    for t in range(t_steps):
        y_ref, h_ref = _ref_cell(x_seq[t], pf32, pb32, params, h_ref)
        err_seq = max(err_seq, float(jnp.max(jnp.abs(y_seq[t] - y_ref))))
    err_h = float(jnp.max(jnp.abs(h_fin - h_ref)))
    assert err_seq < tol_seq, f"sequence mismatch: {err_seq}"
    assert err_h < tol_seq, f"final-H mismatch: {err_h}"

    print("KERNEL_OK")
</pallas_src>

<mosaic_0001>
module attributes {stable_mosaic.version = 11 : i64} {
  func.func @dcrnn_stateless_kernel(%arg0: memref<16x4xf32, #tpu.memory_space<vmem>>, %arg1: memref<2x16x16xbf16, #tpu.memory_space<vmem>>, %arg2: memref<5x4x128xf32, #tpu.memory_space<vmem>>, %arg3: memref<1x128xf32, #tpu.memory_space<vmem>>, %arg4: memref<64x128xf32, #tpu.memory_space<vmem>>, %arg5: memref<1x128xf32, #tpu.memory_space<vmem>>, %arg6: memref<16x128xf32, #tpu.memory_space<vmem>>) attributes {dimension_semantics = [], scalar_prefetch = 0 : i64, scratch_operands = 0 : i64, tpu.core_type = #tpu.core_type<tc>} {
    %c0 = arith.constant 0 : index
    %c0_0 = arith.constant 0 : index
    %0 = vector.load %arg0[%c0, %c0_0] : memref<16x4xf32, #tpu.memory_space<vmem>>, vector<16x4xf32>
    %c0_1 = arith.constant 0 : index
    %c0_2 = arith.constant 0 : index
    %c0_3 = arith.constant 0 : index
    %1 = vector.load %arg1[%c0_1, %c0_2, %c0_3] : memref<2x16x16xbf16, #tpu.memory_space<vmem>>, vector<1x16x16xbf16>
    %2 = vector.shape_cast %1 : vector<1x16x16xbf16> to vector<16x16xbf16>
    %c1 = arith.constant 1 : index
    %c0_4 = arith.constant 0 : index
    %c0_5 = arith.constant 0 : index
    %3 = vector.load %arg1[%c1, %c0_4, %c0_5] : memref<2x16x16xbf16, #tpu.memory_space<vmem>>, vector<1x16x16xbf16>
    %4 = vector.shape_cast %3 : vector<1x16x16xbf16> to vector<16x16xbf16>
    %5 = arith.truncf %0 : vector<16x4xf32> to vector<16x4xbf16>
    %cst = arith.constant dense<0.000000e+00> : vector<16x4xf32>
    %6 = tpu.matmul %2, %5, %cst {dimension_numbers = #tpu.dot_dimension_numbers<[1], [0], [0], [1], [0, 0, 1, 1], [], []>} : vector<16x16xbf16>, vector<16x4xbf16>, vector<16x4xf32> -> vector<16x4xf32>
    %7 = arith.truncf %0 : vector<16x4xf32> to vector<16x4xbf16>
    %cst_6 = arith.constant dense<0.000000e+00> : vector<16x4xf32>
    %8 = tpu.matmul %4, %7, %cst_6 {dimension_numbers = #tpu.dot_dimension_numbers<[1], [0], [0], [1], [0, 0, 1, 1], [], []>} : vector<16x16xbf16>, vector<16x4xbf16>, vector<16x4xf32> -> vector<16x4xf32>
    %9 = arith.truncf %6 : vector<16x4xf32> to vector<16x4xbf16>
    %cst_7 = arith.constant dense<0.000000e+00> : vector<16x4xf32>
    %10 = tpu.matmul %2, %9, %cst_7 {dimension_numbers = #tpu.dot_dimension_numbers<[1], [0], [0], [1], [0, 0, 1, 1], [], []>} : vector<16x16xbf16>, vector<16x4xbf16>, vector<16x4xf32> -> vector<16x4xf32>
    %cst_8 = arith.constant 2.000000e+00 : f32
    %11 = vector.broadcast %cst_8 : f32 to vector<16x4xf32>
    %12 = arith.mulf %11, %10 : vector<16x4xf32>
    %13 = arith.subf %12, %0 : vector<16x4xf32>
    %14 = arith.truncf %8 : vector<16x4xf32> to vector<16x4xbf16>
    %cst_9 = arith.constant dense<0.000000e+00> : vector<16x4xf32>
    %15 = tpu.matmul %4, %14, %cst_9 {dimension_numbers = #tpu.dot_dimension_numbers<[1], [0], [0], [1], [0, 0, 1, 1], [], []>} : vector<16x16xbf16>, vector<16x4xbf16>, vector<16x4xf32> -> vector<16x4xf32>
    %cst_10 = arith.constant 2.000000e+00 : f32
    %16 = vector.broadcast %cst_10 : f32 to vector<16x4xf32>
    %17 = arith.mulf %16, %15 : vector<16x4xf32>
    %18 = arith.subf %17, %0 : vector<16x4xf32>
    %c0_11 = arith.constant 0 : index
    %c0_12 = arith.constant 0 : index
    %c0_13 = arith.constant 0 : index
    %19 = vector.load %arg2[%c0_11, %c0_12, %c0_13] : memref<5x4x128xf32, #tpu.memory_space<vmem>>, vector<1x4x128xf32>
    %20 = vector.shape_cast %19 : vector<1x4x128xf32> to vector<4x128xf32>
    %cst_14 = arith.constant dense<0.000000e+00> : vector<16x128xf32>
    %21 = tpu.matmul %0, %20, %cst_14 {dimension_numbers = #tpu.dot_dimension_numbers<[1], [0], [0], [1], [0, 0, 1, 1], [], []>} : vector<16x4xf32>, vector<4x128xf32>, vector<16x128xf32> -> vector<16x128xf32>
    %c1_15 = arith.constant 1 : index
    %c0_16 = arith.constant 0 : index
    %c0_17 = arith.constant 0 : index
    %22 = vector.load %arg2[%c1_15, %c0_16, %c0_17] : memref<5x4x128xf32, #tpu.memory_space<vmem>>, vector<1x4x128xf32>
    %23 = vector.shape_cast %22 : vector<1x4x128xf32> to vector<4x128xf32>
    %cst_18 = arith.constant dense<0.000000e+00> : vector<16x128xf32>
    %24 = tpu.matmul %6, %23, %cst_18 {dimension_numbers = #tpu.dot_dimension_numbers<[1], [0], [0], [1], [0, 0, 1, 1], [], []>} : vector<16x4xf32>, vector<4x128xf32>, vector<16x128xf32> -> vector<16x128xf32>
    %25 = arith.addf %21, %24 : vector<16x128xf32>
    %c2 = arith.constant 2 : index
    %c0_19 = arith.constant 0 : index
    %c0_20 = arith.constant 0 : index
    %26 = vector.load %arg2[%c2, %c0_19, %c0_20] : memref<5x4x128xf32, #tpu.memory_space<vmem>>, vector<1x4x128xf32>
    %27 = vector.shape_cast %26 : vector<1x4x128xf32> to vector<4x128xf32>
    %cst_21 = arith.constant dense<0.000000e+00> : vector<16x128xf32>
    %28 = tpu.matmul %8, %27, %cst_21 {dimension_numbers = #tpu.dot_dimension_numbers<[1], [0], [0], [1], [0, 0, 1, 1], [], []>} : vector<16x4xf32>, vector<4x128xf32>, vector<16x128xf32> -> vector<16x128xf32>
    %29 = arith.addf %25, %28 : vector<16x128xf32>
    %c3 = arith.constant 3 : index
    %c0_22 = arith.constant 0 : index
    %c0_23 = arith.constant 0 : index
    %30 = vector.load %arg2[%c3, %c0_22, %c0_23] : memref<5x4x128xf32, #tpu.memory_space<vmem>>, vector<1x4x128xf32>
    %31 = vector.shape_cast %30 : vector<1x4x128xf32> to vector<4x128xf32>
    %cst_24 = arith.constant dense<0.000000e+00> : vector<16x128xf32>
    %32 = tpu.matmul %13, %31, %cst_24 {dimension_numbers = #tpu.dot_dimension_numbers<[1], [0], [0], [1], [0, 0, 1, 1], [], []>} : vector<16x4xf32>, vector<4x128xf32>, vector<16x128xf32> -> vector<16x128xf32>
    %33 = arith.addf %29, %32 : vector<16x128xf32>
    %c4 = arith.constant 4 : index
    %c0_25 = arith.constant 0 : index
    %c0_26 = arith.constant 0 : index
    %34 = vector.load %arg2[%c4, %c0_25, %c0_26] : memref<5x4x128xf32, #tpu.memory_space<vmem>>, vector<1x4x128xf32>
    %35 = vector.shape_cast %34 : vector<1x4x128xf32> to vector<4x128xf32>
    %cst_27 = arith.constant dense<0.000000e+00> : vector<16x128xf32>
    %36 = tpu.matmul %18, %35, %cst_27 {dimension_numbers = #tpu.dot_dimension_numbers<[1], [0], [0], [1], [0, 0, 1, 1], [], []>} : vector<16x4xf32>, vector<4x128xf32>, vector<16x128xf32> -> vector<16x128xf32>
    %37 = arith.addf %33, %36 : vector<16x128xf32>
    %c0_28 = arith.constant 0 : index
    %c0_29 = arith.constant 0 : index
    %38 = vector.load %arg3[%c0_28, %c0_29] : memref<1x128xf32, #tpu.memory_space<vmem>>, vector<1x128xf32>
    %39 = vector.broadcast %38 : vector<1x128xf32> to vector<16x128xf32>
    %40 = arith.addf %37, %39 : vector<16x128xf32>
    %41 = vector.extract_strided_slice %40 {offsets = [0, 0], sizes = [16, 64], strides = [1, 1]} : vector<16x128xf32> to vector<16x64xf32>
    %42 = arith.negf %41 : vector<16x64xf32>
    %43 = math.exp %42 : vector<16x64xf32>
    %cst_30 = arith.constant 1.000000e+00 : f32
    %44 = vector.broadcast %cst_30 : f32 to vector<16x64xf32>
    %45 = arith.addf %44, %43 : vector<16x64xf32>
    %46 = arith.divf %44, %45 : vector<16x64xf32>
    %47 = vector.extract_strided_slice %40 {offsets = [0, 64], sizes = [16, 64], strides = [1, 1]} : vector<16x128xf32> to vector<16x64xf32>
    %48 = math.tanh %47 : vector<16x64xf32>
    %cst_31 = arith.constant 1.000000e+00 : f32
    %49 = vector.broadcast %cst_31 : f32 to vector<16x64xf32>
    %50 = arith.subf %49, %46 : vector<16x64xf32>
    %51 = arith.mulf %50, %48 : vector<16x64xf32>
    %cst_32 = arith.constant 0.000000e+00 : f32
    %52 = vector.broadcast %cst_32 : f32 to vector<16x64xf32>
    %53 = arith.maximumf %51, %52 : vector<16x64xf32>
    %c0_33 = arith.constant 0 : index
    %c0_34 = arith.constant 0 : index
    %54 = vector.load %arg4[%c0_33, %c0_34] : memref<64x128xf32, #tpu.memory_space<vmem>>, vector<64x128xf32>
    %cst_35 = arith.constant dense<0.000000e+00> : vector<16x128xf32>
    %55 = tpu.matmul %53, %54, %cst_35 {dimension_numbers = #tpu.dot_dimension_numbers<[1], [0], [0], [1], [0, 0, 1, 1], [], []>} : vector<16x64xf32>, vector<64x128xf32>, vector<16x128xf32> -> vector<16x128xf32>
    %c0_36 = arith.constant 0 : index
    %c0_37 = arith.constant 0 : index
    %56 = vector.load %arg5[%c0_36, %c0_37] : memref<1x128xf32, #tpu.memory_space<vmem>>, vector<1x128xf32>
    %57 = vector.broadcast %56 : vector<1x128xf32> to vector<16x128xf32>
    %58 = arith.addf %55, %57 : vector<16x128xf32>
    %c0_38 = arith.constant 0 : index
    %c0_39 = arith.constant 0 : index
    %59 = vector.load %arg6[%c0_38, %c0_39] : memref<16x128xf32, #tpu.memory_space<vmem>>, vector<16x128xf32>
    tpu.vector_store %arg6[%c0_38, %c0_39], %58 {strides = array<i32>} : memref<16x128xf32, #tpu.memory_space<vmem>>, vector<16x128xf32>,
    return
  }
}

</mosaic_0001>

<llo_original>
// kernel: tpu_custom_call.1
$region0: #{tpu_custom_call.1}
  #allocation0 [shape = 'u32[]', space=smem, size = 0x4, offset = 0x4, fixed_abs, tag = 'smem constant byte address 0x4 - core index']
  #allocation1 [shape = 'u32[72,128]{1,0:T(1,128)}', space=vmem, size = 0x9000, scoped, tag = 'internal scratch']
  %s0 = inlined_call_operand.vmem [shape: f32[16,4], index: 0, kind: input, shape index: {}]
  %s1 = inlined_call_operand.hbm [shape: bf16[2,16,16], index: 1, kind: input, shape index: {}]
  %s2 = inlined_call_operand.vmem [shape: f32[5,4,128], index: 2, kind: input, shape index: {}]
  %s3 = inlined_call_operand.vmem [shape: f32[1,128], index: 3, kind: input, shape index: {}]
  %s4 = inlined_call_operand.hbm [shape: f32[64,128], index: 4, kind: input, shape index: {}]
  %s5 = inlined_call_operand.vmem [shape: f32[1,128], index: 5, kind: input, shape index: {}]
  %s6 = inlined_call_operand.hbm [shape: f32[16,128], index: 6, kind: output, shape index: {}]
  %s7 = sld [smem:[#allocation0]]
  $region42: #{tpu_custom_call.1} parent=0
    _
  %s9 = ssub.s32 1, %s7
  %s10 = scalar_select 0, %s9, %s7
  $region1: #{tpu_custom_call.1} parent=0
    #allocation2 [shape = 'u8[8192]{0}', space=vmem, size = 0x2000, scoped, tag = 'input window, operand 1, single buffered']
    #allocation3 [shape = 's32[1]{0}', space=sflag, size = 0x4, scoped, tag = 'scoped memory for tpu_custom_call.1']
    #allocation4 [shape = 's32[1]{0}', space=sflag, size = 0x4, scoped, tag = 'scoped memory for tpu_custom_call.1']
    #allocation5 [shape = 'u8[32768]{0}', space=vmem, size = 0x8000, scoped, tag = 'input window, operand 4, single buffered']
    #allocation6 [shape = 's32[1]{0}', space=sflag, size = 0x4, scoped, tag = 'scoped memory for tpu_custom_call.1']
    #allocation7 [shape = 'u8[8192]{0}', space=vmem, size = 0x2000, scoped, tag = 'output window, operand 0, single buffered']
    %11 = vsyncpa [#allocation3], 0
    %12 = vsyncpa [#allocation6], 0
    %13 = vsyncpa [#allocation4], 0
    // Predicated region
    $region2: #{tpu_custom_call.1} parent=1 // pred_check
      _
    $region3: #{tpu_custom_call.1} parent=1 // pred_check_branch
      %15 = sbr.rel (0) target = $region5
    $region4: #{tpu_custom_call.1} parent=1 // pred_region
      _
    $region5: #{tpu_custom_call.1} parent=1 // pred_fallthru
      _
    // Predicated region
    $region6: #{tpu_custom_call.1} parent=1 // pred_check
      _
    $region7: #{tpu_custom_call.1} parent=1 // pred_check_branch
      %17 = sbr.rel (0) target = $region9
    $region8: #{tpu_custom_call.1} parent=1 // pred_region
      %19 = vsyncadd [#allocation3], 0
      %s20 = sshll.u32 %s1, 4
      %s21 = int_to_ptr.hbm [resolvable:$true] %s20
      %s22 = sshll.u32 [#allocation2], 4
      %s23 = int_to_ptr.vmem [resolvable:$true] %s22
      %28 = dma.hbm_to_vmem [thread:$0]  %s21, 256, %s23, [#allocation3], 64, 64, 4
    $region9: #{tpu_custom_call.1} parent=1 // pred_fallthru
      _
    // Predicated region
    $region10: #{tpu_custom_call.1} parent=1 // pred_check
      _
    $region11: #{tpu_custom_call.1} parent=1 // pred_check_branch
      %30 = sbr.rel (0) target = $region13
    $region12: #{tpu_custom_call.1} parent=1 // pred_region
      _
    $region13: #{tpu_custom_call.1} parent=1 // pred_fallthru
      _
    // Predicated region
    $region14: #{tpu_custom_call.1} parent=1 // pred_check
      _
    $region15: #{tpu_custom_call.1} parent=1 // pred_check_branch
      %32 = sbr.rel (0) target = $region17
    $region16: #{tpu_custom_call.1} parent=1 // pred_region
      _
    $region17: #{tpu_custom_call.1} parent=1 // pred_fallthru
      _
    // Predicated region
    $region18: #{tpu_custom_call.1} parent=1 // pred_check
      _
    $region19: #{tpu_custom_call.1} parent=1 // pred_check_branch
      %34 = sbr.rel (0) target = $region21
    $region20: #{tpu_custom_call.1} parent=1 // pred_region
      %36 = vsyncadd [#allocation6], 0
      %s37 = sshll.u32 %s4, 4
      %s38 = int_to_ptr.hbm [resolvable:$true] %s37
      %s39 = sshll.u32 [#allocation5], 4
      %s40 = int_to_ptr.vmem [resolvable:$true] %s39
      %45 = dma.hbm_to_vmem [thread:$0]  %s38, 1024, %s40, [#allocation6], 128, 128, 8
    $region21: #{tpu_custom_call.1} parent=1 // pred_fallthru
      _
    // Predicated region
    $region22: #{tpu_custom_call.1} parent=1 // pred_check
      _
    $region23: #{tpu_custom_call.1} parent=1 // pred_check_branch
      %47 = sbr.rel (0) target = $region25
    $region24: #{tpu_custom_call.1} parent=1 // pred_region
      _
    $region25: #{tpu_custom_call.1} parent=1 // pred_fallthru
      _
    // Predicated region
    $region26: #{tpu_custom_call.1} parent=1 // pred_check
      _
    $region27: #{tpu_custom_call.1} parent=1 // pred_check_branch
      %49 = sbr.rel (0) target = $region29
    $region28: #{tpu_custom_call.1} parent=1 // pred_region
      %51 = dma.done [#allocation3], 256
    $region29: #{tpu_custom_call.1} parent=1 // pred_fallthru
      _
    // Predicated region
    $region30: #{tpu_custom_call.1} parent=1 // pred_check
      _
    $region31: #{tpu_custom_call.1} parent=1 // pred_check_branch
      %53 = sbr.rel (0) target = $region33
    $region32: #{tpu_custom_call.1} parent=1 // pred_region
      %55 = dma.done [#allocation6], 1024
    $region33: #{tpu_custom_call.1} parent=1 // pred_fallthru
      _
    %v57 = vld [vmem:[%s0] sm:$0xff]
    %v58 = vld [vmem:[%s0 + $0x8] sm:$0xff]
    %v59 = vld [vmem:[#allocation2] sm:$0xf]
    %v60 = vld [vmem:[#allocation2 + $0x4] sm:$0xf]
    %s61 = scalar_lea.vmem [#allocation2], 8
    %v62 = vld [vmem:[%s61] sm:$0xf]
    %v63 = vld [vmem:[%s61 + $0x4] sm:$0xf]
    %v64 = vpack.c.bf16 %v58, %v57
    %v67 = vunpack.c.l.b16 %v59
    %v68 = vunpack.c.l.b16 %v60
    %v69 = vpack.c.b16 %v68, %v67
    %vm70 = vcmask 130048
    %v72 = vsel %vm70, %v69, 0
    %74 = vmatpush.bf16.msra.mxu0 0
    %75 = vmatpush.bf16.msra.mxu0 0
    %76 = vmatpush.bf16.msra.mxu0 0
    %77 = vmatpush.bf16.msra.mxu0 0
    %78 = vmatpush.bf16.msra.mxu0 0
    %79 = vmatpush.bf16.msra.mxu0 0
    %80 = vmatpush.bf16.msra.mxu0 0
    %81 = vmatpush.bf16.msra.mxu0 %v64
    %82 = vmatmul.bf16.gmra.mxu0 %v72
    %v83 = vpop.f32.mrf.mxu0
    %v84 = vadd.f32 0.0, %v83
    %v85 = vpop.f32.mrf.mxu0
    %v86 = vadd.f32 0.0, %v85
    %87 = vdwg.mxu0
    %v90 = vunpack.c.l.b16 %v62
    %v91 = vunpack.c.l.b16 %v63
    %v92 = vpack.c.b16 %v91, %v90
    %v94 = vsel %vm70, %v92, 0
    %96 = vmatpush.bf16.msra.mxu0 0
    %97 = vmatpush.bf16.msra.mxu0 0
    %98 = vmatpush.bf16.msra.mxu0 0
    %99 = vmatpush.bf16.msra.mxu0 0
    %100 = vmatpush.bf16.msra.mxu0 0
    %101 = vmatpush.bf16.msra.mxu0 0
    %102 = vmatpush.bf16.msra.mxu0 0
    %103 = vmatpush.bf16.msra.mxu0 %v64
    %104 = vmatmul.bf16.gmra.mxu0 %v94
    %v105 = vpop.f32.mrf.mxu0
    %v106 = vadd.f32 0.0, %v105
    %v107 = vpop.f32.mrf.mxu0
    %v108 = vadd.f32 0.0, %v107
    %109 = vdwg.mxu0
    %v110 = vpack.c.bf16 %v86, %v84
    %111 = vmatpush.bf16.msra.mxu0 0
    %112 = vmatpush.bf16.msra.mxu0 0
    %113 = vmatpush.bf16.msra.mxu0 0
    %114 = vmatpush.bf16.msra.mxu0 0
    %115 = vmatpush.bf16.msra.mxu0 0
    %116 = vmatpush.bf16.msra.mxu0 0
    %117 = vmatpush.bf16.msra.mxu0 0
    %118 = vmatpush.bf16.msra.mxu0 %v110
    %119 = vmatmul.bf16.gmra.mxu0 %v72
    %v120 = vpop.f32.mrf.mxu0
    %v121 = vadd.f32 0.0, %v120
    %v122 = vpop.f32.mrf.mxu0
    %v123 = vadd.f32 0.0, %v122
    %124 = vdwg.mxu0
    %v125 = vmul.f32 %v121, 2.0
    %v126 = vmul.f32 %v123, 2.0
    %v127 = vsub.f32 %v125, %v57
    %v128 = vsub.f32 %v126, %v58
    %v129 = vpack.c.bf16 %v108, %v106
    %130 = vmatpush.bf16.msra.mxu0 0
    %131 = vmatpush.bf16.msra.mxu0 0
    %132 = vmatpush.bf16.msra.mxu0 0
    %133 = vmatpush.bf16.msra.mxu0 0
    %134 = vmatpush.bf16.msra.mxu0 0
    %135 = vmatpush.bf16.msra.mxu0 0
    %136 = vmatpush.bf16.msra.mxu0 0
    %137 = vmatpush.bf16.msra.mxu0 %v129
    %138 = vmatmul.bf16.gmra.mxu0 %v94
    %v139 = vpop.f32.mrf.mxu0
    %v140 = vadd.f32 0.0, %v139
    %v141 = vpop.f32.mrf.mxu0
    %v142 = vadd.f32 0.0, %v141
    %143 = vdwg.mxu0
    %v144 = vmul.f32 %v140, 2.0
    %v145 = vmul.f32 %v142, 2.0
    %v146 = vsub.f32 %v144, %v57
    %v147 = vsub.f32 %v145, %v58
    %v148 = vld [vmem:[%s2] sm:$0xf]
    %s149 = scalar_lea.vmem %s2, 4
    %v150 = vld [vmem:[%s149] sm:$0xf]
    %vm151 = vcmask 31744
    %v153 = vsel %vm151, %v84, 0
    %v156 = vsel %vm151, %v86, 0
    %vm158 = vcmask 1043456
    %v160 = vsel %vm158, %v150, 0
    %162 = vmatpush.msra.mxu0 0.0
    %163 = vmatpush.msra.mxu0 0.0
    %164 = vmatpush.msra.mxu0 0.0
    %165 = vmatpush.msra.mxu0 0.0
    %166 = vmatpush.msra.mxu0 0.0
    %167 = vmatpush.msra.mxu0 0.0
    %168 = vmatpush.msra.mxu0 0.0
    %169 = vmatpush.msra.mxu0 0.0
    %170 = vmatpush.msra.mxu0 0.0
    %171 = vmatpush.msra.mxu0 0.0
    %172 = vmatpush.msra.mxu0 0.0
    %173 = vmatpush.msra.mxu0 0.0
    %174 = vmatpush.msra.mxu0 0.0
    %175 = vmatpush.msra.mxu0 0.0
    %176 = vmatpush.msra.mxu0 0.0
    %177 = vmatpush.msra.mxu0 %v160
    %178 = vmatmul.f32.gmra.mxu0 %v153
    %v179 = vpop.f32.mrf.mxu0
    %v180 = vadd.f32 0.0, %v179
    %181 = vmatmul.f32.gmra.mxu0 %v156
    %v182 = vpop.f32.mrf.mxu0
    %v183 = vadd.f32 0.0, %v182
    %184 = vdwg.mxu0
    %v186 = vsel %vm151, %v57, 0
    %v189 = vsel %vm151, %v58, 0
    %v192 = vsel %vm158, %v148, 0
    %194 = vmatpush.msra.mxu0 0.0
    %195 = vmatpush.msra.mxu0 0.0
    %196 = vmatpush.msra.mxu0 0.0
    %197 = vmatpush.msra.mxu0 0.0
    %198 = vmatpush.msra.mxu0 0.0
    %199 = vmatpush.msra.mxu0 0.0
    %200 = vmatpush.msra.mxu0 0.0
    %201 = vmatpush.msra.mxu0 0.0
    %202 = vmatpush.msra.mxu0 0.0
    %203 = vmatpush.msra.mxu0 0.0
    %204 = vmatpush.msra.mxu0 0.0
    %205 = vmatpush.msra.mxu0 0.0
    %206 = vmatpush.msra.mxu0 0.0
    %207 = vmatpush.msra.mxu0 0.0
    %208 = vmatpush.msra.mxu0 0.0
    %209 = vmatpush.msra.mxu0 %v192
    %210 = vmatmul.f32.gmra.mxu0 %v186
    %v211 = vpop.f32.mrf.mxu0
    %v212 = vadd.f32 %v180, %v211
    %213 = vmatmul.f32.gmra.mxu0 %v189
    %v214 = vpop.f32.mrf.mxu0
    %v215 = vadd.f32 %v183, %v214
    %216 = vdwg.mxu0
    %s217 = scalar_lea.vmem %s2, 8
    %v218 = vld [vmem:[%s217] sm:$0xf]
    %v220 = vsel %vm151, %v106, 0
    %v223 = vsel %vm151, %v108, 0
    %v226 = vsel %vm158, %v218, 0
    %228 = vmatpush.msra.mxu0 0.0
    %229 = vmatpush.msra.mxu0 0.0
    %230 = vmatpush.msra.mxu0 0.0
    %231 = vmatpush.msra.mxu0 0.0
    %232 = vmatpush.msra.mxu0 0.0
    %233 = vmatpush.msra.mxu0 0.0
    %234 = vmatpush.msra.mxu0 0.0
    %235 = vmatpush.msra.mxu0 0.0
    %236 = vmatpush.msra.mxu0 0.0
    %237 = vmatpush.msra.mxu0 0.0
    %238 = vmatpush.msra.mxu0 0.0
    %239 = vmatpush.msra.mxu0 0.0
    %240 = vmatpush.msra.mxu0 0.0
    %241 = vmatpush.msra.mxu0 0.0
    %242 = vmatpush.msra.mxu0 0.0
    %243 = vmatpush.msra.mxu0 %v226
    %244 = vmatmul.f32.gmra.mxu0 %v220
    %v245 = vpop.f32.mrf.mxu0
    %v246 = vadd.f32 0.0, %v245
    %247 = vmatmul.f32.gmra.mxu0 %v223
    %v248 = vpop.f32.mrf.mxu0
    %v249 = vadd.f32 0.0, %v248
    %250 = vdwg.mxu0
    %v251 = vadd.f32 %v212, %v246
    %v252 = vadd.f32 %v215, %v249
    %s253 = scalar_lea.vmem %s2, 12
    %v254 = vld [vmem:[%s253] sm:$0xf]
    %v256 = vsel %vm151, %v127, 0
    %v259 = vsel %vm151, %v128, 0
    %v262 = vsel %vm158, %v254, 0
    %264 = vmatpush.msra.mxu0 0.0
    %265 = vmatpush.msra.mxu0 0.0
    %266 = vmatpush.msra.mxu0 0.0
    %267 = vmatpush.msra.mxu0 0.0
    %268 = vmatpush.msra.mxu0 0.0
    %269 = vmatpush.msra.mxu0 0.0
    %270 = vmatpush.msra.mxu0 0.0
    %271 = vmatpush.msra.mxu0 0.0
    %272 = vmatpush.msra.mxu0 0.0
    %273 = vmatpush.msra.mxu0 0.0
    %274 = vmatpush.msra.mxu0 0.0
    %275 = vmatpush.msra.mxu0 0.0
    %276 = vmatpush.msra.mxu0 0.0
    %277 = vmatpush.msra.mxu0 0.0
    %278 = vmatpush.msra.mxu0 0.0
    %279 = vmatpush.msra.mxu0 %v262
    %280 = vmatmul.f32.gmra.mxu0 %v256
    %v281 = vpop.f32.mrf.mxu0
    %v282 = vadd.f32 0.0, %v281
    %283 = vmatmul.f32.gmra.mxu0 %v259
    %v284 = vpop.f32.mrf.mxu0
    %v285 = vadd.f32 0.0, %v284
    %286 = vdwg.mxu0
    %v287 = vadd.f32 %v251, %v282
    %v288 = vadd.f32 %v252, %v285
    %s289 = scalar_lea.vmem %s2, 16
    %v290 = vld [vmem:[%s289] sm:$0xf]
    %v292 = vsel %vm151, %v146, 0
    %v295 = vsel %vm151, %v147, 0
    %v298 = vsel %vm158, %v290, 0
    %300 = vmatpush.msra.mxu0 0.0
    %301 = vmatpush.msra.mxu0 0.0
    %302 = vmatpush.msra.mxu0 0.0
    %303 = vmatpush.msra.mxu0 0.0
    %304 = vmatpush.msra.mxu0 0.0
    %305 = vmatpush.msra.mxu0 0.0
    %306 = vmatpush.msra.mxu0 0.0
    %307 = vmatpush.msra.mxu0 0.0
    %308 = vmatpush.msra.mxu0 0.0
    %309 = vmatpush.msra.mxu0 0.0
    %310 = vmatpush.msra.mxu0 0.0
    %311 = vmatpush.msra.mxu0 0.0
    %312 = vmatpush.msra.mxu0 0.0
    %313 = vmatpush.msra.mxu0 0.0
    %314 = vmatpush.msra.mxu0 0.0
    %315 = vmatpush.msra.mxu0 %v298
    %316 = vmatmul.f32.gmra.mxu0 %v292
    %v317 = vpop.f32.mrf.mxu0
    %v318 = vadd.f32 0.0, %v317
    %319 = vmatmul.f32.gmra.mxu0 %v295
    %v320 = vpop.f32.mrf.mxu0
    %v321 = vadd.f32 0.0, %v320
    %322 = vdwg.mxu0
    %v323 = vadd.f32 %v287, %v318
    %v324 = vadd.f32 %v288, %v321
    %v325 = vld [vmem:[%s3] sm:$0x1]
    %v327 = vperm.slane %v325, 0
    %v329 = vadd.f32 %v323, %v327
    %v330 = vadd.f32 %v324, %v327
    %v331 = vxor.u32 %v329, 2147483648
    %v332 = vxor.u32 %v330, 2147483648
    %v333 = vmul.f32 %v331, 1.442695
    %v334 = vpow.pop %v333
    %v335 = vmul.f32 %v332, 1.442695
    %v336 = vpow.pop %v335
    %v337 = vadd.f32 %v334, 1.0
    %v338 = vadd.f32 %v336, 1.0
    %v339 = vrcp.pop %v337
    %v340 = vmul.f32 %v337, %v339
    %v341 = vsub.f32 1.0, %v340
    %v342 = vmul.f32 %v339, %v341
    %v343 = vadd.f32 %v339, %v342
    %vm344 = vweird.f32 %v337
    %vm345 = vweird.f32 %v339
    %vm346 = vmor %vm344, %vm345
    %v347 = vsel %vm346, %v339, %v343
    %v348 = vand.u32 2147483647, %v337
    %vm349 = vcmp.eq.f32.partialorder %v348, 8.507059e+37
    %v350 = vand.u32 %v337, 2147483648
    %v351 = vor.u32 1.1754944e-38, %v350
    %v352 = vsel %vm349, %v351, %v347
    %v353 = vmul.f32 1.0, %v352
    %v354 = vrcp.pop %v338
    %v355 = vmul.f32 %v338, %v354
    %v356 = vsub.f32 1.0, %v355
    %v357 = vmul.f32 %v354, %v356
    %v358 = vadd.f32 %v354, %v357
    %vm359 = vweird.f32 %v338
    %vm360 = vweird.f32 %v354
    %vm361 = vmor %vm359, %vm360
    %v362 = vsel %vm361, %v354, %v358
    %v363 = vand.u32 2147483647, %v338
    %vm364 = vcmp.eq.f32.partialorder %v363, 8.507059e+37
    %v365 = vand.u32 %v338, 2147483648
    %v366 = vor.u32 1.1754944e-38, %v365
    %v367 = vsel %vm364, %v366, %v362
    %v368 = vmul.f32 1.0, %v367
    %v369 = vtanh.pop %v329
    %v370 = vtanh.pop %v330
    %v371 = vsub.f32 1.0, %v353
    %v372 = vsub.f32 1.0, %v368
    %375 = vrot.lane.b32.xlu0 %v369, 64
    %v376 = vpop.permute.xlu0 %375
    %377 = vrot.lane.b32.xlu0 %v370, 64
    %v378 = vpop.permute.xlu0 %377
    %v381 = vmul.f32 %v371, %v376
    %v382 = vmul.f32 %v372, %v378
    %v383 = vmax.f32 %v381, 0.0
    %v384 = vmax.f32 %v382, 0.0
    %v385 = vld [vmem:[#allocation5] sm:$0xff]
    %v386 = vld [vmem:[#allocation5 + $0x8] sm:$0xff]
    %v387 = vld [vmem:[#allocation5 + $0x10] sm:$0xff]
    %v388 = vld [vmem:[#allocation5 + $0x18] sm:$0xff]
    %v389 = vld [vmem:[#allocation5 + $0x20] sm:$0xff]
    %v390 = vld [vmem:[#allocation5 + $0x28] sm:$0xff]
    %v391 = vld [vmem:[#allocation5 + $0x30] sm:$0xff]
    %v392 = vld [vmem:[#allocation5 + $0x38] sm:$0xff]
    %v393 = vld [vmem:[%s5] sm:$0x1]
    %v395 = vperm.slane %v393, 0
    %vm397 = vcmask 523264
    %v399 = vsel %vm397, %v383, 0
    %v402 = vsel %vm397, %v384, 0
    %404 = vmatpush.msra.mxu0 0.0
    %405 = vmatpush.msra.mxu0 0.0
    %406 = vmatpush.msra.mxu0 0.0
    %407 = vmatpush.msra.mxu0 0.0
    %408 = vmatpush.msra.mxu0 0.0
    %409 = vmatpush.msra.mxu0 0.0
    %410 = vmatpush.msra.mxu0 0.0
    %411 = vmatpush.msra.mxu0 0.0
    %412 = vmatpush.msra.mxu0 %v392
    %413 = vmatpush.msra.mxu0 %v391
    %414 = vmatpush.msra.mxu0 %v390
    %415 = vmatpush.msra.mxu0 %v389
    %416 = vmatpush.msra.mxu0 %v388
    %417 = vmatpush.msra.mxu0 %v387
    %418 = vmatpush.msra.mxu0 %v386
    %419 = vmatpush.msra.mxu0 %v385
    %420 = vmatmul.f32.gmra.mxu0 %v399
    %v421 = vpop.f32.mrf.mxu0
    %v422 = vadd.f32 %v395, %v421
    %423 = vmatmul.f32.gmra.mxu0 %v402
    %v424 = vpop.f32.mrf.mxu0
    %v425 = vadd.f32 %v395, %v424
    %426 = vdwg.mxu0
    %427 = vst [vmem:[#allocation7] sm:$0xff] %v422
    %428 = vst [vmem:[#allocation7 + $0x8] sm:$0xff] %v425
    // Predicated region
    $region34: #{tpu_custom_call.1} parent=1 // pred_check
      _
    $region35: #{tpu_custom_call.1} parent=1 // pred_check_branch
      %430 = sbr.rel (0) target = $region37
    $region36: #{tpu_custom_call.1} parent=1 // pred_region
      %432 = vsyncadd [#allocation4], 0
      %s433 = sshll.u32 [#allocation7], 4
      %s434 = int_to_ptr.vmem [resolvable:$true] %s433
      %s435 = sshll.u32 %s6, 4
      %s436 = int_to_ptr.hbm [resolvable:$true] %s435
      %441 = dma.vmem_to_hbm [thread:$0]  %s434, 256, %s436, [#allocation4], 128, 128, 8
    $region37: #{tpu_custom_call.1} parent=1 // pred_fallthru
      _
    // Predicated region
    $region38: #{tpu_custom_call.1} parent=1 // pred_check
      _
    $region39: #{tpu_custom_call.1} parent=1 // pred_check_branch
      %443 = sbr.rel (0) target = $region41
    $region40: #{tpu_custom_call.1} parent=1 // pred_region
      %445 = dma.done [#allocation4], 256
    $region41: #{tpu_custom_call.1} parent=1 // pred_fallthru
      _
    %446 = vsyncpa [#allocation3], 1
    %447 = vsyncpa [#allocation6], 1
    %448 = vsyncpa [#allocation4], 1

</llo_original>
